<compile_context>
chip_gen: v7x
topology: tpu7x:2x2x1
jax: 0.10.0
libtpu: 0.0.40
codegen_flags: <defaults>
</compile_context>

<pallas_src>
import jax
import jax.numpy as jnp
from jax.experimental import pallas as pl
from jax.experimental.pallas import tpu as pltpu


# ----------------------------------------------------------------------------
# Pallas kernel: fused 1x1-conv chain + ReLU + sigmoid gating, per pixel tile.
# Refs (batch dim squeezed out by the BlockSpec):
#   xw_ref: (C_w, tn)   xo_ref: (C_o, tn)
#   w1_ref: (inner, C_w)  bsum_ref: (inner, 1)  w2_ref: (inner, C_o)
#   pw_ref: (1, inner)    pb_ref: (1, 1)
# ----------------------------------------------------------------------------
def attention_grid_kernel(xw_ref, xo_ref, w1_ref, bsum_ref, w2_ref,
                          pw_ref, pb_ref, o_ref):
    xw = xw_ref[...].astype(jnp.float32)          # (C_w, tn)
    xo = xo_ref[...].astype(jnp.float32)          # (C_o, tn)

    # Both 1x1-conv branches (+ folded BN, biases pre-summed) -> (inner, tn)
    # NOTE: these dots have tiny M/K; while HBM-bound the MXU cost is hidden.
    h = jnp.dot(w1_ref[...], xw, preferred_element_type=jnp.float32)
    h = h + jnp.dot(w2_ref[...], xo, preferred_element_type=jnp.float32)
    h = jnp.maximum(h + bsum_ref[...], 0.0)       # ReLU

    # psi: 1x1 conv inner -> 1 (+ folded BN), then sigmoid  -> (1, tn)
    psi = jnp.dot(pw_ref[...], h, preferred_element_type=jnp.float32) + pb_ref[...]
    gate = jax.nn.sigmoid(psi)

    # pixel-wise mask broadcast over the channels-to-weight
    o_ref[...] = (gate * xw).astype(o_ref.dtype)


def _round_up(x, m):
    return ((x + m - 1) // m) * m


def attention_grid_pallas(xw, xo, w1, bsum, w2, pw, pb, *, tn=4096):
    """xw: (B, C_w, HW), xo: (B, C_o, HW). Streams in xw/xo dtype, computes f32."""
    B, c_w, hw = xw.shape
    c_o = xo.shape[1]
    inner = w1.shape[0]
    itemsize = jnp.dtype(xw.dtype).itemsize

    # ---- tile-size selection (kernel is HBM-bandwidth bound) -----------------
    # Multiple of 128 lanes; never wildly larger than the pixel axis.
    tn_eff = min(_round_up(max(tn, 128), 128), _round_up(hw, 128))
    # Keep the double-buffered streamed VMEM footprint modest (~12 MiB) so it
    # fits the default scoped VMEM of every generation (v5e 16 MiB, v7x 32 MiB).
    bytes_per_lane = 2 * (2 * c_w + c_o) * itemsize   # in+in+out, double-buffered
    vmem_cap = 12 * 1024 * 1024
    tn_eff = min(tn_eff, max(128, (vmem_cap // bytes_per_lane) // 128 * 128))
    # Keep enough grid steps that v7x's two TensorCores both get work.
    while tn_eff > 512 and B * pl.cdiv(hw, tn_eff) < 8:
        tn_eff = max(512, _round_up(tn_eff // 2, 128))

    grid = (B, pl.cdiv(hw, tn_eff))       # ragged last pixel tile is masked
    wmap = lambda b, i: (0, 0)            # weights: one resident block

    return pl.pallas_call(
        attention_grid_kernel,
        out_shape=jax.ShapeDtypeStruct((B, c_w, hw), xw.dtype),
        grid_spec=pltpu.PrefetchScalarGridSpec(
            num_scalar_prefetch=0,
            grid=grid,
            in_specs=[
                pl.BlockSpec((None, c_w, tn_eff), lambda b, i: (b, 0, i)),  # x_to_weight
                pl.BlockSpec((None, c_o, tn_eff), lambda b, i: (b, 0, i)),  # x_other
                pl.BlockSpec((inner, c_w), wmap),   # folded W_to_weight
                pl.BlockSpec((inner, 1), wmap),     # folded (b1 + b2)
                pl.BlockSpec((inner, c_o), wmap),   # folded W_other
                pl.BlockSpec((1, inner), wmap),     # folded psi weight
                pl.BlockSpec((1, 1), wmap),         # folded psi bias
            ],
            out_specs=pl.BlockSpec((None, c_w, tn_eff), lambda b, i: (b, 0, i)),
        ),
        compiler_params=pltpu.CompilerParams(
            dimension_semantics=("parallel", "parallel")),
    )(xw, xo, w1, bsum, w2, pw, pb)


# ----------------------------------------------------------------------------
# Parameter setup (deterministic) and BN folding (glue, plain JAX)
# ----------------------------------------------------------------------------
def fold_bn(w, b, gamma, beta, mean, var, eps=1e-5):
    """Fold inference-mode BatchNorm into a 1x1-conv weight (out, in) + bias."""
    scale = gamma / jnp.sqrt(var + eps)
    w_f = w * scale[:, None]
    b_f = scale * (b - mean) + beta
    return w_f, b_f


def make_params(key, chann_to_weight, other_chann, inner_channels_factor=2):
    inner = max(chann_to_weight // inner_channels_factor, 1)
    ks = jax.random.split(key, 12)

    # Conv weights (1x1 kernels collapsed to (out, in))
    w1 = jax.random.normal(ks[0], (inner, chann_to_weight), jnp.float32) * 0.3
    b1 = jax.random.normal(ks[1], (inner,), jnp.float32) * 0.1
    w2 = jax.random.normal(ks[2], (inner, other_chann), jnp.float32) * 0.3
    wp = jax.random.normal(ks[3], (1, inner), jnp.float32) * 0.3
    bp = jax.random.normal(ks[4], (1,), jnp.float32) * 0.1

    # BatchNorm (inference-mode) params / running stats — deterministic, nonzero
    g1 = 1.0 + 0.1 * jax.random.normal(ks[5], (inner,), jnp.float32)
    be1 = 0.1 * jax.random.normal(ks[6], (inner,), jnp.float32)
    m1 = 0.05 * jax.random.normal(ks[7], (inner,), jnp.float32)
    v1 = 1.0 + 0.1 * jnp.abs(jax.random.normal(ks[8], (inner,), jnp.float32))

    g2 = 1.0 + 0.1 * jax.random.normal(ks[9], (inner,), jnp.float32)
    be2 = 0.1 * jax.random.normal(ks[10], (inner,), jnp.float32)
    m2 = 0.05 * jax.random.normal(ks[11], (inner,), jnp.float32)
    v2 = jnp.ones((inner,), jnp.float32)

    gp = jnp.array([1.05], jnp.float32)
    bep = jnp.array([0.02], jnp.float32)
    mp = jnp.array([0.01], jnp.float32)
    vp = jnp.array([1.1], jnp.float32)

    w1f, b1f = fold_bn(w1, b1, g1, be1, m1, v1)
    w2f, b2f = fold_bn(w2, jnp.zeros((inner,), jnp.float32), g2, be2, m2, v2)
    wpf, bpf = fold_bn(wp, bp, gp, bep, mp, vp)

    return dict(
        w1=w1f,
        w2=w2f,
        bsum=(b1f + b2f).reshape(inner, 1),   # the two branch biases fold into one
        pw=wpf,
        pb=bpf.reshape(1, 1),
    )


def attention_grid_forward(x_to_weight, x_other, params, *, tn=4096):
    """x_to_weight: (B, C_w, H, W), x_other: (B, C_o, H, W)  (NCHW).

    The reshapes below are free views (no transpose, no extra HBM pass).
    bf16 inputs are supported and halve HBM traffic; compute stays f32.
    """
    B, C_w, H, W = x_to_weight.shape
    C_o = x_other.shape[1]
    HW = H * W

    xw = x_to_weight.reshape(B, C_w, HW)
    xo = x_other.reshape(B, C_o, HW)

    out = attention_grid_pallas(
        xw, xo,
        params["w1"], params["bsum"], params["w2"],
        params["pw"], params["pb"], tn=tn)

    return out.reshape(B, C_w, H, W)


def attention_grid_reference(x_to_weight, x_other, params):
    """Pure-JAX reference of the same math (BN folded, eval mode)."""
    B, C_w, H, W = x_to_weight.shape
    C_o = x_other.shape[1]
    xw = x_to_weight.reshape(B, C_w, H * W).astype(jnp.float32)
    xo = x_other.reshape(B, C_o, H * W).astype(jnp.float32)
    h = (jnp.einsum("ij,bjn->bin", params["w1"], xw)
         + jnp.einsum("ij,bjn->bin", params["w2"], xo)
         + params["bsum"][None])
    h = jnp.maximum(h, 0.0)
    psi = jnp.einsum("ij,bjn->bin", params["pw"], h) + params["pb"][None]
    gate = jax.nn.sigmoid(psi)
    out = gate * xw
    return out.reshape(B, C_w, H, W)


if __name__ == "__main__":
    B, C_w, C_o, H, W = 2, 4, 8, 16, 16

    key = jax.random.PRNGKey(0)
    k_x, k_o, k_p = jax.random.split(key, 3)
    x_to_weight = jax.random.normal(k_x, (B, C_w, H, W), jnp.float32)
    x_other = jax.random.normal(k_o, (B, C_o, H, W), jnp.float32)
    params = make_params(k_p, C_w, C_o)

    # --- f32 path -----------------------------------------------------------
    out = attention_grid_forward(x_to_weight, x_other, params)
    out = jax.block_until_ready(out)
    ref = attention_grid_reference(x_to_weight, x_other, params)
    assert out.shape == (B, C_w, H, W)
    assert jnp.allclose(out, ref, atol=1e-5, rtol=1e-5), "mismatch vs reference"

    # --- ragged spatial size (H*W not a multiple of 128 -> masked last tile) -
    B2, H2, W2 = 3, 10, 10
    xw2 = jax.random.normal(jax.random.PRNGKey(1), (B2, C_w, H2, W2), jnp.float32)
    xo2 = jax.random.normal(jax.random.PRNGKey(2), (B2, C_o, H2, W2), jnp.float32)
    out2 = jax.block_until_ready(attention_grid_forward(xw2, xo2, params))
    ref2 = attention_grid_reference(xw2, xo2, params)
    assert jnp.allclose(out2, ref2, atol=1e-5, rtol=1e-5), "ragged-tile mismatch"

    # --- bf16 streaming path (halved HBM bytes; loose tolerance vs f32 ref) --
    out_bf16 = jax.block_until_ready(
        attention_grid_forward(x_to_weight.astype(jnp.bfloat16),
                               x_other.astype(jnp.bfloat16), params))
    assert out_bf16.dtype == jnp.bfloat16
    assert jnp.allclose(out_bf16.astype(jnp.float32), ref, atol=1e-1, rtol=1e-1), \
        "bf16 streaming mismatch"

    print("KERNEL_OK")
</pallas_src>

<mosaic_0001>
module attributes {stable_mosaic.version = 11 : i64} {
  func.func @attention_grid_kernel(%arg0: i32, %arg1: i32, %arg2: memref<1x4x256xf32, #tpu.memory_space<vmem>>, %arg3: memref<1x8x256xf32, #tpu.memory_space<vmem>>, %arg4: memref<2x4xf32, #tpu.memory_space<vmem>>, %arg5: memref<2x1xf32, #tpu.memory_space<vmem>>, %arg6: memref<2x8xf32, #tpu.memory_space<vmem>>, %arg7: memref<1x2xf32, #tpu.memory_space<vmem>>, %arg8: memref<1x1xf32, #tpu.memory_space<vmem>>, %arg9: memref<1x4x256xf32, #tpu.memory_space<vmem>>) attributes {dimension_semantics = [#tpu.dimension_semantics<parallel>, #tpu.dimension_semantics<parallel>], iteration_bounds = array<i64: 2, 1>, scalar_prefetch = 0 : i64, scratch_operands = 0 : i64, tpu.core_type = #tpu.core_type<tc>, window_params = [{transform_indices = @transform_0, window_bounds = array<i64: 1, 4, 256>}, {transform_indices = @transform_1, window_bounds = array<i64: 1, 8, 256>}, {pipeline_mode = #tpu.pipeline_mode<synchronous>, transform_indices = @transform_2, window_bounds = array<i64: 2, 4>}, {pipeline_mode = #tpu.pipeline_mode<synchronous>, transform_indices = @transform_3, window_bounds = array<i64: 2, 1>}, {pipeline_mode = #tpu.pipeline_mode<synchronous>, transform_indices = @transform_4, window_bounds = array<i64: 2, 8>}, {pipeline_mode = #tpu.pipeline_mode<synchronous>, transform_indices = @transform_5, window_bounds = array<i64: 1, 2>}, {pipeline_mode = #tpu.pipeline_mode<synchronous>, transform_indices = @transform_6, window_bounds = array<i64: 1, 1>}, {transform_indices = @transform_7, window_bounds = array<i64: 1, 4, 256>}]} {
    %c0 = arith.constant 0 : index
    %c0_0 = arith.constant 0 : index
    %c0_1 = arith.constant 0 : index
    %0 = vector.load %arg2[%c0, %c0_0, %c0_1] : memref<1x4x256xf32, #tpu.memory_space<vmem>>, vector<1x4x256xf32>
    %1 = vector.shape_cast %0 : vector<1x4x256xf32> to vector<4x256xf32>
    %c0_2 = arith.constant 0 : index
    %c0_3 = arith.constant 0 : index
    %c0_4 = arith.constant 0 : index
    %2 = vector.load %arg3[%c0_2, %c0_3, %c0_4] : memref<1x8x256xf32, #tpu.memory_space<vmem>>, vector<1x8x256xf32>
    %3 = vector.shape_cast %2 : vector<1x8x256xf32> to vector<8x256xf32>
    %c0_5 = arith.constant 0 : index
    %c0_6 = arith.constant 0 : index
    %4 = vector.load %arg4[%c0_5, %c0_6] : memref<2x4xf32, #tpu.memory_space<vmem>>, vector<2x4xf32>
    %cst = arith.constant dense<0.000000e+00> : vector<2x256xf32>
    %5 = tpu.matmul %4, %1, %cst {dimension_numbers = #tpu.dot_dimension_numbers<[1], [0], [0], [1], [0, 0, 1, 1], [], []>} : vector<2x4xf32>, vector<4x256xf32>, vector<2x256xf32> -> vector<2x256xf32>
    %c0_7 = arith.constant 0 : index
    %c0_8 = arith.constant 0 : index
    %6 = vector.load %arg6[%c0_7, %c0_8] : memref<2x8xf32, #tpu.memory_space<vmem>>, vector<2x8xf32>
    %cst_9 = arith.constant dense<0.000000e+00> : vector<2x256xf32>
    %7 = tpu.matmul %6, %3, %cst_9 {dimension_numbers = #tpu.dot_dimension_numbers<[1], [0], [0], [1], [0, 0, 1, 1], [], []>} : vector<2x8xf32>, vector<8x256xf32>, vector<2x256xf32> -> vector<2x256xf32>
    %8 = arith.addf %5, %7 : vector<2x256xf32>
    %c0_10 = arith.constant 0 : index
    %c0_11 = arith.constant 0 : index
    %9 = vector.load %arg5[%c0_10, %c0_11] : memref<2x1xf32, #tpu.memory_space<vmem>>, vector<2x1xf32>
    %10 = vector.broadcast %9 : vector<2x1xf32> to vector<2x256xf32>
    %11 = arith.addf %8, %10 : vector<2x256xf32>
    %cst_12 = arith.constant 0.000000e+00 : f32
    %12 = vector.broadcast %cst_12 : f32 to vector<2x256xf32>
    %13 = arith.maximumf %11, %12 : vector<2x256xf32>
    %c0_13 = arith.constant 0 : index
    %c0_14 = arith.constant 0 : index
    %14 = vector.load %arg7[%c0_13, %c0_14] : memref<1x2xf32, #tpu.memory_space<vmem>>, vector<1x2xf32>
    %cst_15 = arith.constant dense<0.000000e+00> : vector<1x256xf32>
    %15 = tpu.matmul %14, %13, %cst_15 {dimension_numbers = #tpu.dot_dimension_numbers<[1], [0], [0], [1], [0, 0, 1, 1], [], []>} : vector<1x2xf32>, vector<2x256xf32>, vector<1x256xf32> -> vector<1x256xf32>
    %c0_16 = arith.constant 0 : index
    %c0_17 = arith.constant 0 : index
    %16 = vector.load %arg8[%c0_16, %c0_17] : memref<1x1xf32, #tpu.memory_space<vmem>>, vector<1x1xf32>
    %17 = vector.broadcast %16 : vector<1x1xf32> to vector<1x256xf32>
    %18 = arith.addf %15, %17 : vector<1x256xf32>
    %19 = arith.negf %18 : vector<1x256xf32>
    %20 = math.exp %19 : vector<1x256xf32>
    %cst_18 = arith.constant 1.000000e+00 : f32
    %21 = vector.broadcast %cst_18 : f32 to vector<1x256xf32>
    %22 = arith.addf %21, %20 : vector<1x256xf32>
    %23 = arith.divf %21, %22 : vector<1x256xf32>
    %24 = vector.broadcast %23 : vector<1x256xf32> to vector<4x256xf32>
    %25 = arith.mulf %24, %1 : vector<4x256xf32>
    %c0_19 = arith.constant 0 : index
    %c0_20 = arith.constant 0 : index
    %c0_21 = arith.constant 0 : index
    %26 = vector.load %arg9[%c0_19, %c0_20, %c0_21] : memref<1x4x256xf32, #tpu.memory_space<vmem>>, vector<1x4x256xf32>
    %27 = vector.shape_cast %26 : vector<1x4x256xf32> to vector<4x256xf32>
    %28 = vector.shape_cast %25 : vector<4x256xf32> to vector<1x4x256xf32>
    tpu.vector_store %arg9[%c0_19, %c0_20, %c0_21], %28 {strides = array<i32>} : memref<1x4x256xf32, #tpu.memory_space<vmem>>, vector<1x4x256xf32>,
    return
  }
  func.func @transform_0(%arg0: i32, %arg1: i32) -> (i32, i32, i32) {
    %c0_i32 = arith.constant 0 : i32
    %c0_i32_0 = arith.constant 0 : i32
    return %arg0, %c0_i32, %arg1 : i32, i32, i32
  }
  func.func @transform_1(%arg0: i32, %arg1: i32) -> (i32, i32, i32) {
    %c0_i32 = arith.constant 0 : i32
    %c0_i32_0 = arith.constant 0 : i32
    return %arg0, %c0_i32, %arg1 : i32, i32, i32
  }
  func.func @transform_2(%arg0: i32, %arg1: i32) -> (i32, i32) {
    %c0_i32 = arith.constant 0 : i32
    %c0_i32_0 = arith.constant 0 : i32
    %c0_i32_1 = arith.constant 0 : i32
    return %c0_i32, %c0_i32_0 : i32, i32
  }
  func.func @transform_3(%arg0: i32, %arg1: i32) -> (i32, i32) {
    %c0_i32 = arith.constant 0 : i32
    %c0_i32_0 = arith.constant 0 : i32
    %c0_i32_1 = arith.constant 0 : i32
    return %c0_i32, %c0_i32_0 : i32, i32
  }
  func.func @transform_4(%arg0: i32, %arg1: i32) -> (i32, i32) {
    %c0_i32 = arith.constant 0 : i32
    %c0_i32_0 = arith.constant 0 : i32
    %c0_i32_1 = arith.constant 0 : i32
    return %c0_i32, %c0_i32_0 : i32, i32
  }
  func.func @transform_5(%arg0: i32, %arg1: i32) -> (i32, i32) {
    %c0_i32 = arith.constant 0 : i32
    %c0_i32_0 = arith.constant 0 : i32
    %c0_i32_1 = arith.constant 0 : i32
    return %c0_i32, %c0_i32_0 : i32, i32
  }
  func.func @transform_6(%arg0: i32, %arg1: i32) -> (i32, i32) {
    %c0_i32 = arith.constant 0 : i32
    %c0_i32_0 = arith.constant 0 : i32
    %c0_i32_1 = arith.constant 0 : i32
    return %c0_i32, %c0_i32_0 : i32, i32
  }
  func.func @transform_7(%arg0: i32, %arg1: i32) -> (i32, i32, i32) {
    %c0_i32 = arith.constant 0 : i32
    %c0_i32_0 = arith.constant 0 : i32
    return %arg0, %c0_i32, %arg1 : i32, i32, i32
  }
}

</mosaic_0001>

<llo_original>
// kernel: tpu_custom_call.1
$region0: #{tpu_custom_call.1}
  #allocation0 [shape = 'u32[]', space=smem, size = 0x4, offset = 0x4, fixed_abs, tag = 'smem constant byte address 0x4 - core index']
  #allocation1 [shape = 'u32[144,128]{1,0:T(1,128)}', space=vmem, size = 0x12000, scoped, tag = 'internal scratch']
  #allocation2 [shape = 'f32[1,1]{1,0:T(1,128)S(1)}', space=vmem, size = 0x200, scoped, tag = 'scoped memory for tpu_custom_call.1']
  %s0 = inlined_call_operand.hbm [shape: f32[2,4,256], index: 0, kind: input, shape index: {}]
  %s1 = inlined_call_operand.hbm [shape: f32[2,8,256], index: 1, kind: input, shape index: {}]
  %s2 = inlined_call_operand.vmem [shape: f32[2,4], index: 2, kind: input, shape index: {}]
  %s3 = inlined_call_operand.vmem [shape: f32[2,1], index: 3, kind: input, shape index: {}]
  %s4 = inlined_call_operand.vmem [shape: f32[2,8], index: 4, kind: input, shape index: {}]
  %s5 = inlined_call_operand.vmem [shape: f32[1,2], index: 5, kind: input, shape index: {}]
  %s6 = inlined_call_operand.<no memory space> [shape: f32[1,1], index: 6, kind: input, shape index: {}]
  %s7 = inlined_call_operand.hbm [shape: f32[2,4,256], index: 7, kind: output, shape index: {}]
  %s8 = sld [smem:[#allocation0]]
  $region69: #{tpu_custom_call.1} parent=0
    _
  %s10 = ssub.s32 1, %s8
  %s11 = scalar_select 0, %s10, %s8
  %v12 = vstv %s6
  %13 = vst [vmem:[#allocation2] sm:$0x1] %v12
  $region1: #{tpu_custom_call.1} parent=0
    #allocation3 [shape = 'u8[8192]{0}', space=vmem, size = 0x2000, scoped, tag = 'input window, operand 0']
    #allocation4 [shape = 's32[2]{0}', space=sflag, size = 0x8, scoped, tag = 'scoped memory for tpu_custom_call.1']
    #allocation5 [shape = 's32[2]{0}', space=sflag, size = 0x8, scoped, tag = 'scoped memory for tpu_custom_call.1']
    #allocation6 [shape = 'u8[16384]{0}', space=vmem, size = 0x4000, scoped, tag = 'input window, operand 1']
    #allocation7 [shape = 's32[2]{0}', space=sflag, size = 0x8, scoped, tag = 'scoped memory for tpu_custom_call.1']
    #allocation8 [shape = 'u8[8192]{0}', space=vmem, size = 0x2000, scoped, tag = 'output window, operand 0']
    %14 = vsyncpa [#allocation4], 0
    %s15 = scalar_lea.sflag [#allocation4], 1
    %16 = vsyncpa %s15, 0
    %17 = vsyncpa [#allocation7], 0
    %s18 = scalar_lea.sflag [#allocation7], 1
    %19 = vsyncpa %s18, 0
    %20 = vsyncpa [#allocation5], 0
    %s21 = scalar_lea.sflag [#allocation5], 1
    %22 = vsyncpa %s21, 0
    loop: start=0, step=1, limit=4
    $region2: #{tpu_custom_call.1} parent=1 // loop_pre_header
      _
    $region3: #{tpu_custom_call.1} parent=1 // loop_header
      %s24 = sphi 0, %s28
      %p25 = scmp.ge.s32.totalorder %s24, 4
      %s31 = sphi 0, %s43
      %s32 = sphi 0, %s39
      %s33 = sphi 0, %s31
      %s34 = sphi 0, %s32
      %s35 = sphi 0, %s33
      %s36 = sphi 0, %s34
      %s48 = sphi 0, %s50
      %s51 = sphi 0, %s48
      %s52 = sphi 0, %s51
      %s68 = sphi 0, %s52
      %s76 = sphi 0, %s78
      %s79 = sphi 0, %s76
      %s80 = sphi 0, %s79
      %s96 = sphi 0, %s80
      %s100 = sphi 0, %s100
      %s102 = sphi 0, %s100
      %s103 = sphi 0, %s102
      %s117 = sphi 0, %s103
      %s121 = sphi 0, %s121
      %s123 = sphi 0, %s121
      %s124 = sphi 0, %s123
      %s138 = sphi 0, %s124
      %s142 = sphi 0, %s142
      %s144 = sphi 0, %s142
      %s145 = sphi 0, %s144
      %s159 = sphi 0, %s145
      %s163 = sphi 0, %s163
      %s165 = sphi 0, %s163
      %s166 = sphi 0, %s165
      %s180 = sphi 0, %s166
      %s184 = sphi 0, %s184
      %s186 = sphi 0, %s184
      %s187 = sphi 0, %s186
      %s201 = sphi 0, %s187
      %s209 = sphi 0, %s211
      %s212 = sphi 0, %s209
      %s213 = sphi 0, %s212
      %s229 = sphi 0, %s213
    $region4: #{tpu_custom_call.1} parent=1 // loop_header_branch
      %27 = sbr.rel (%p25) target = $region8
    $region5: #{tpu_custom_call.1} parent=1 // loop_body
      %s29 = ssub.s32 %s24, 1
      %s30 = ssub.s32 %s24, 2
      %s37 = sadd.s32 1, %s32
      %p38 = scmp.ge.s32.totalorder %s37, 1
      %s39 = scalar_select %p38, 0, %s37
      %s40 = sadd.s32 1, %s31
      %s41 = scalar_select %p38, %s40, %s31
      %p42 = scmp.ge.s32.totalorder %s41, 2
      %s43 = scalar_select %p42, 0, %s41
      %s44 = ssub.s32 %s31, %s43
      %s45 = ssub.s32 %s32, %s39
      %s46 = sor.u32 %s44, %s45
      %p47 = scmp.eq.s32.totalorder %s46, 0
      %s49 = sadd.s32 %s48, 1
      %s50 = scalar_select %p47, %s48, %s49
      %p53 = pneg %p47
      %p54 = scmp.eq.s32.totalorder %s24, 1
      %p55 = por %p53, %p54
      %p56 = scmp.ne.s32.totalorder %s48, %s51
      %p57 = scmp.eq.s32.totalorder %s24, 0
      %p58 = por %p56, %p57
      %p59 = scmp.ne.s32.totalorder %s48, %s51
      %p60 = scmp.eq.s32.totalorder %s29, 1
      %p61 = por %p59, %p60
      %p62 = scmp.ne.s32.totalorder %s51, %s52
      %p63 = scmp.eq.s32.totalorder %s29, 0
      %p64 = por %p62, %p63
      %p65 = scmp.ne.s32.totalorder %s51, %s52
      %p66 = scmp.eq.s32.totalorder %s30, 1
      %p67 = por %p65, %p66
      %p69 = scmp.ne.s32.totalorder %s52, %s68
      %p70 = scmp.eq.s32.totalorder %s30, 0
      %p71 = por %p69, %p70
      %s72 = ssub.s32 %s31, %s43
      %s73 = ssub.s32 %s32, %s39
      %s74 = sor.u32 %s72, %s73
      %p75 = scmp.eq.s32.totalorder %s74, 0
      %s77 = sadd.s32 %s76, 1
      %s78 = scalar_select %p75, %s76, %s77
      %p81 = pneg %p75
      %p82 = scmp.eq.s32.totalorder %s24, 1
      %p83 = por %p81, %p82
      %p84 = scmp.ne.s32.totalorder %s76, %s79
      %p85 = scmp.eq.s32.totalorder %s24, 0
      %p86 = por %p84, %p85
      %p87 = scmp.ne.s32.totalorder %s76, %s79
      %p88 = scmp.eq.s32.totalorder %s29, 1
      %p89 = por %p87, %p88
      %p90 = scmp.ne.s32.totalorder %s79, %s80
      %p91 = scmp.eq.s32.totalorder %s29, 0
      %p92 = por %p90, %p91
      %p93 = scmp.ne.s32.totalorder %s79, %s80
      %p94 = scmp.eq.s32.totalorder %s30, 1
      %p95 = por %p93, %p94
      %p97 = scmp.ne.s32.totalorder %s80, %s96
      %p98 = scmp.eq.s32.totalorder %s30, 0
      %p99 = por %p97, %p98
      %s101 = sadd.s32 %s100, 1
      %p104 = scmp.eq.s32.totalorder %s24, 1
      %p105 = scmp.ne.s32.totalorder %s100, %s102
      %p106 = scmp.eq.s32.totalorder %s24, 0
      %p107 = por %p105, %p106
      %p108 = scmp.ne.s32.totalorder %s100, %s102
      %p109 = scmp.eq.s32.totalorder %s29, 1
      %p110 = por %p108, %p109
      %p111 = scmp.ne.s32.totalorder %s102, %s103
      %p112 = scmp.eq.s32.totalorder %s29, 0
      %p113 = por %p111, %p112
      %p114 = scmp.ne.s32.totalorder %s102, %s103
      %p115 = scmp.eq.s32.totalorder %s30, 1
      %p116 = por %p114, %p115
      %p118 = scmp.ne.s32.totalorder %s103, %s117
      %p119 = scmp.eq.s32.totalorder %s30, 0
      %p120 = por %p118, %p119
      %s122 = sadd.s32 %s121, 1
      %p125 = scmp.eq.s32.totalorder %s24, 1
      %p126 = scmp.ne.s32.totalorder %s121, %s123
      %p127 = scmp.eq.s32.totalorder %s24, 0
      %p128 = por %p126, %p127
      %p129 = scmp.ne.s32.totalorder %s121, %s123
      %p130 = scmp.eq.s32.totalorder %s29, 1
      %p131 = por %p129, %p130
      %p132 = scmp.ne.s32.totalorder %s123, %s124
      %p133 = scmp.eq.s32.totalorder %s29, 0
      %p134 = por %p132, %p133
      %p135 = scmp.ne.s32.totalorder %s123, %s124
      %p136 = scmp.eq.s32.totalorder %s30, 1
      %p137 = por %p135, %p136
      %p139 = scmp.ne.s32.totalorder %s124, %s138
      %p140 = scmp.eq.s32.totalorder %s30, 0
      %p141 = por %p139, %p140
      %s143 = sadd.s32 %s142, 1
      %p146 = scmp.eq.s32.totalorder %s24, 1
      %p147 = scmp.ne.s32.totalorder %s142, %s144
      %p148 = scmp.eq.s32.totalorder %s24, 0
      %p149 = por %p147, %p148
      %p150 = scmp.ne.s32.totalorder %s142, %s144
      %p151 = scmp.eq.s32.totalorder %s29, 1
      %p152 = por %p150, %p151
      %p153 = scmp.ne.s32.totalorder %s144, %s145
      %p154 = scmp.eq.s32.totalorder %s29, 0
      %p155 = por %p153, %p154
      %p156 = scmp.ne.s32.totalorder %s144, %s145
      %p157 = scmp.eq.s32.totalorder %s30, 1
      %p158 = por %p156, %p157
      %p160 = scmp.ne.s32.totalorder %s145, %s159
      %p161 = scmp.eq.s32.totalorder %s30, 0
      %p162 = por %p160, %p161
      %s164 = sadd.s32 %s163, 1
      %p167 = scmp.eq.s32.totalorder %s24, 1
      %p168 = scmp.ne.s32.totalorder %s163, %s165
      %p169 = scmp.eq.s32.totalorder %s24, 0
      %p170 = por %p168, %p169
      %p171 = scmp.ne.s32.totalorder %s163, %s165
      %p172 = scmp.eq.s32.totalorder %s29, 1
      %p173 = por %p171, %p172
      %p174 = scmp.ne.s32.totalorder %s165, %s166
      %p175 = scmp.eq.s32.totalorder %s29, 0
      %p176 = por %p174, %p175
      %p177 = scmp.ne.s32.totalorder %s165, %s166
      %p178 = scmp.eq.s32.totalorder %s30, 1
      %p179 = por %p177, %p178
      %p181 = scmp.ne.s32.totalorder %s166, %s180
      %p182 = scmp.eq.s32.totalorder %s30, 0
      %p183 = por %p181, %p182
      %s185 = sadd.s32 %s184, 1
      %p188 = scmp.eq.s32.totalorder %s24, 1
      %p189 = scmp.ne.s32.totalorder %s184, %s186
      %p190 = scmp.eq.s32.totalorder %s24, 0
      %p191 = por %p189, %p190
      %p192 = scmp.ne.s32.totalorder %s184, %s186
      %p193 = scmp.eq.s32.totalorder %s29, 1
      %p194 = por %p192, %p193
      %p195 = scmp.ne.s32.totalorder %s186, %s187
      %p196 = scmp.eq.s32.totalorder %s29, 0
      %p197 = por %p195, %p196
      %p198 = scmp.ne.s32.totalorder %s186, %s187
      %p199 = scmp.eq.s32.totalorder %s30, 1
      %p200 = por %p198, %p199
      %p202 = scmp.ne.s32.totalorder %s187, %s201
      %p203 = scmp.eq.s32.totalorder %s30, 0
      %p204 = por %p202, %p203
      %s205 = ssub.s32 %s31, %s43
      %s206 = ssub.s32 %s32, %s39
      %s207 = sor.u32 %s205, %s206
      %p208 = scmp.eq.s32.totalorder %s207, 0
      %s210 = sadd.s32 %s209, 1
      %s211 = scalar_select %p208, %s209, %s210
      %p214 = pneg %p208
      %p215 = scmp.eq.s32.totalorder %s24, 1
      %p216 = por %p214, %p215
      %p217 = scmp.ne.s32.totalorder %s209, %s212
      %p218 = scmp.eq.s32.totalorder %s24, 0
      %p219 = por %p217, %p218
      %p220 = scmp.ne.s32.totalorder %s209, %s212
      %p221 = scmp.eq.s32.totalorder %s29, 1
      %p222 = por %p220, %p221
      %p223 = scmp.ne.s32.totalorder %s212, %s213
      %p224 = scmp.eq.s32.totalorder %s29, 0
      %p225 = por %p223, %p224
      %p226 = scmp.ne.s32.totalorder %s212, %s213
      %p227 = scmp.eq.s32.totalorder %s30, 1
      %p228 = por %p226, %p227
      %p230 = scmp.ne.s32.totalorder %s213, %s229
      %p231 = scmp.eq.s32.totalorder %s30, 0
      %p232 = por %p230, %p231
      %p233 = scmp.le.s32.totalorder 1, %s24
      %p234 = scmp.lt.s32.totalorder %s24, 3
      %p235 = pnand %p233, %p234
      %p236 = pneg %p235
      // Predicated region
      $region9: #{tpu_custom_call.1} parent=5 // pred_check
        _
      $region10: #{tpu_custom_call.1} parent=5 // pred_check_branch
        %238 = sbr.rel (%p235) target = $region12
      $region11: #{tpu_custom_call.1} parent=5 // pred_region
        %s239 = ssub.s32 %s24, 1
        // Predicated region
        $region13: #{tpu_custom_call.1} parent=11 // pred_check
          %p240 = pneg %p113
        $region14: #{tpu_custom_call.1} parent=11 // pred_check_branch
          %242 = sbr.rel (%p240) target = $region16
        $region15: #{tpu_custom_call.1} parent=11 // pred_region
          _
        $region16: #{tpu_custom_call.1} parent=11 // pred_fallthru
          _
        // Predicated region
        $region17: #{tpu_custom_call.1} parent=11 // pred_check
          %p243 = pneg %p134
        $region18: #{tpu_custom_call.1} parent=11 // pred_check_branch
          %245 = sbr.rel (%p243) target = $region20
        $region19: #{tpu_custom_call.1} parent=11 // pred_region
          _
        $region20: #{tpu_custom_call.1} parent=11 // pred_fallthru
          _
        // Predicated region
        $region21: #{tpu_custom_call.1} parent=11 // pred_check
          %p246 = pneg %p155
        $region22: #{tpu_custom_call.1} parent=11 // pred_check_branch
          %248 = sbr.rel (%p246) target = $region24
        $region23: #{tpu_custom_call.1} parent=11 // pred_region
          _
        $region24: #{tpu_custom_call.1} parent=11 // pred_fallthru
          _
        // Predicated region
        $region25: #{tpu_custom_call.1} parent=11 // pred_check
          %p249 = pneg %p176
        $region26: #{tpu_custom_call.1} parent=11 // pred_check_branch
          %251 = sbr.rel (%p249) target = $region28
        $region27: #{tpu_custom_call.1} parent=11 // pred_region
          _
        $region28: #{tpu_custom_call.1} parent=11 // pred_fallthru
          _
        // Predicated region
        $region29: #{tpu_custom_call.1} parent=11 // pred_check
          %p252 = pneg %p197
        $region30: #{tpu_custom_call.1} parent=11 // pred_check_branch
          %254 = sbr.rel (%p252) target = $region32
        $region31: #{tpu_custom_call.1} parent=11 // pred_region
          _
        $region32: #{tpu_custom_call.1} parent=11 // pred_fallthru
          _
      $region12: #{tpu_custom_call.1} parent=5 // pred_fallthru
        _
      %p255 = scmp.lt.s32.totalorder %s24, 2
      // Predicated region
      $region33: #{tpu_custom_call.1} parent=5 // pred_check
        %p256 = pneg %p255
      $region34: #{tpu_custom_call.1} parent=5 // pred_check_branch
        %258 = sbr.rel (%p256) target = $region36
      $region35: #{tpu_custom_call.1} parent=5 // pred_region
        // Predicated region
        $region37: #{tpu_custom_call.1} parent=35 // pred_check
          %p259 = pneg %p58
        $region38: #{tpu_custom_call.1} parent=35 // pred_check_branch
          %261 = sbr.rel (%p259) target = $region40
        $region39: #{tpu_custom_call.1} parent=35 // pred_region
          %s262 = sand.u32 %s48, 1
          %s263 = scalar_lea.sflag [#allocation4], %s262
          %s264 = sand.u32 %s48, 1
          %s265 = smul.addr %s264, 8
          %s266 = scalar_lea.vmem [#allocation3], %s265
          %s267 = smul.u32 2, %s32
          %s269 = ssub.s32 128, 128
          %270 = vsyncadd %s263, %s269
          %s271 = smul.addr %s31, 2
          %s272 = sadd.s32 %s267, %s271
          %s273 = smul.addr %s272, 64
          %s274 = scalar_lea.hbm %s0, %s273
          %s276 = sshll.u32 %s266, 4
          %s277 = int_to_ptr.vmem [resolvable:$true] %s276
          %279 = dma.hbm_to_vmem [thread:$0]  %s274, 128, %s277, %s263
        $region40: #{tpu_custom_call.1} parent=35 // pred_fallthru
          _
        // Predicated region
        $region41: #{tpu_custom_call.1} parent=35 // pred_check
          %p280 = pneg %p86
        $region42: #{tpu_custom_call.1} parent=35 // pred_check_branch
          %282 = sbr.rel (%p280) target = $region44
        $region43: #{tpu_custom_call.1} parent=35 // pred_region
          %s283 = sand.u32 %s76, 1
          %s284 = scalar_lea.sflag [#allocation7], %s283
          %s285 = sand.u32 %s76, 1
          %s286 = smul.addr %s285, 16
          %s287 = scalar_lea.vmem [#allocation6], %s286
          %s288 = smul.u32 2, %s32
          %s290 = ssub.s32 256, 256
          %291 = vsyncadd %s284, %s290
          %s292 = smul.addr %s31, 2
          %s293 = sadd.s32 %s288, %s292
          %s294 = smul.addr %s293, 128
          %s295 = scalar_lea.hbm %s1, %s294
          %s297 = sshll.u32 %s287, 4
          %s298 = int_to_ptr.vmem [resolvable:$true] %s297
          %300 = dma.hbm_to_vmem [thread:$0]  %s295, 256, %s298, %s284
        $region44: #{tpu_custom_call.1} parent=35 // pred_fallthru
          _
      $region36: #{tpu_custom_call.1} parent=5 // pred_fallthru
        _
      %p301 = scmp.le.s32.totalorder 1, %s24
      %p302 = scmp.lt.s32.totalorder %s24, 3
      %p303 = pnand %p301, %p302
      %p304 = pneg %p303
      // Predicated region
      $region45: #{tpu_custom_call.1} parent=5 // pred_check
        _
      $region46: #{tpu_custom_call.1} parent=5 // pred_check_branch
        %306 = sbr.rel (%p303) target = $region48
      $region47: #{tpu_custom_call.1} parent=5 // pred_region
        %s307 = ssub.s32 %s24, 1
        %s308 = sand.u32 %s51, 1
        %s309 = scalar_lea.sflag [#allocation4], %s308
        %s310 = sand.u32 %s51, 1
        %s311 = smul.addr %s310, 8
        %s312 = scalar_lea.vmem [#allocation3], %s311
        // Predicated region
        $region49: #{tpu_custom_call.1} parent=47 // pred_check
          %p313 = pneg %p64
        $region50: #{tpu_custom_call.1} parent=47 // pred_check_branch
          %315 = sbr.rel (%p313) target = $region52
        $region51: #{tpu_custom_call.1} parent=47 // pred_region
          %316 = dma.done %s309, 128
        $region52: #{tpu_custom_call.1} parent=47 // pred_fallthru
          _
        %s317 = sand.u32 %s79, 1
        %s318 = scalar_lea.sflag [#allocation7], %s317
        %s319 = sand.u32 %s79, 1
        %s320 = smul.addr %s319, 16
        %s321 = scalar_lea.vmem [#allocation6], %s320
        // Predicated region
        $region53: #{tpu_custom_call.1} parent=47 // pred_check
          %p322 = pneg %p92
        $region54: #{tpu_custom_call.1} parent=47 // pred_check_branch
          %324 = sbr.rel (%p322) target = $region56
        $region55: #{tpu_custom_call.1} parent=47 // pred_region
          %325 = dma.done %s318, 256
        $region56: #{tpu_custom_call.1} parent=47 // pred_fallthru
          _
        %s326 = sand.u32 %s51, 1
        %s327 = scalar_lea.sflag [#allocation4], %s326
        %s328 = sand.u32 %s51, 1
        %s329 = smul.addr %s328, 8
        %s330 = scalar_lea.vmem [#allocation3], %s329
        %p331 = pneg %p64
        %p332 = pneg %p61
        %s333 = sand.u32 %s79, 1
        %s334 = scalar_lea.sflag [#allocation7], %s333
        %s335 = sand.u32 %s79, 1
        %s336 = smul.addr %s335, 16
        %s337 = scalar_lea.vmem [#allocation6], %s336
        %p338 = pneg %p92
        %p339 = pneg %p89
        %p340 = pneg %p113
        %p341 = pneg %p110
        %p342 = pneg %p134
        %p343 = pneg %p131
        %p344 = pneg %p155
        %p345 = pneg %p152
        %p346 = pneg %p176
        %p347 = pneg %p173
        %p348 = pneg %p197
        %p349 = pneg %p194
        %p350 = pneg %p225
        %p351 = pneg %p222
        %s352 = sand.u32 %s212, 1
        %s353 = scalar_lea.sflag [#allocation5], %s352
        %s354 = sand.u32 %s212, 1
        %s355 = smul.addr %s354, 8
        %s356 = scalar_lea.vmem [#allocation8], %s355
        %s357 = smul.u32 2, %s34
        %s358 = smul.u32 2, %s34
        %s359 = smul.u32 2, %s34
        %v360 = vld [vmem:[%s312] sm:$0xff]
        %v361 = vld [vmem:[%s321] sm:$0xff]
        %v362 = vld [vmem:[%s321 + $0x8] sm:$0xff]
        %v363 = vld [vmem:[%s2] sm:$0x3]
        %v364 = vld [vmem:[%s4] sm:$0x3]
        %vm365 = vcmask 64512
        %v367 = vsel %vm365, %v364, 0
        %369 = vmatprep.subr.mxu0 %v362
        %370 = vmatpush1.msra.mxu0 %v361
        %371 = vmatprep.subr.mxu0 0.0
        %372 = vmatpush1.msra.mxu0 0.0
        %373 = vmatprep.subr.mxu0 0.0
        %374 = vmatpush1.msra.mxu0 0.0
        %375 = vmatprep.subr.mxu0 0.0
        %376 = vmatpush1.msra.mxu0 0.0
        %377 = vmatprep.subr.mxu0 0.0
        %378 = vmatpush1.msra.mxu0 0.0
        %379 = vmatprep.subr.mxu0 0.0
        %380 = vmatpush1.msra.mxu0 0.0
        %381 = vmatprep.subr.mxu0 0.0
        %382 = vmatpush1.msra.mxu0 0.0
        %383 = vmatprep.subr.mxu0 0.0
        %384 = vmatpush1.msra.mxu0 0.0
        %385 = vmatprep.subr.mxu0 0.0
        %386 = vmatpush1.msra.mxu0 0.0
        %387 = vmatprep.subr.mxu0 0.0
        %388 = vmatpush1.msra.mxu0 0.0
        %389 = vmatprep.subr.mxu0 0.0
        %390 = vmatpush1.msra.mxu0 0.0
        %391 = vmatprep.subr.mxu0 0.0
        %392 = vmatpush1.msra.mxu0 0.0
        %393 = vmatprep.subr.mxu0 0.0
        %394 = vmatpush1.msra.mxu0 0.0
        %395 = vmatprep.subr.mxu0 0.0
        %396 = vmatpush1.msra.mxu0 0.0
        %397 = vmatprep.subr.mxu0 0.0
        %398 = vmatpush1.msra.mxu0 0.0
        %399 = vmatprep.subr.mxu0 0.0
        %400 = vmatpush1.msra.mxu0 0.0
        %401 = vmatprep.subr.mxu0 0.0
        %402 = vmatpush1.msra.mxu0 0.0
        %403 = vmatprep.subr.mxu0 0.0
        %404 = vmatpush1.msra.mxu0 0.0
        %405 = vmatprep.subr.mxu0 0.0
        %406 = vmatpush1.msra.mxu0 0.0
        %407 = vmatprep.subr.mxu0 0.0
        %408 = vmatpush1.msra.mxu0 0.0
        %409 = vmatprep.subr.mxu0 0.0
        %410 = vmatpush1.msra.mxu0 0.0
        %411 = vmatprep.subr.mxu0 0.0
        %412 = vmatpush1.msra.mxu0 0.0
        %413 = vmatprep.subr.mxu0 0.0
        %414 = vmatpush1.msra.mxu0 0.0
        %415 = vmatprep.subr.mxu0 0.0
        %416 = vmatpush1.msra.mxu0 0.0
        %417 = vmatprep.subr.mxu0 0.0
        %418 = vmatpush1.msra.mxu0 0.0
        %419 = vmatprep.subr.mxu0 0.0
        %420 = vmatpush1.msra.mxu0 0.0
        %421 = vmatprep.subr.mxu0 0.0
        %422 = vmatpush1.msra.mxu0 0.0
        %423 = vmatprep.subr.mxu0 0.0
        %424 = vmatpush1.msra.mxu0 0.0
        %425 = vmatprep.subr.mxu0 0.0
        %426 = vmatpush1.msra.mxu0 0.0
        %427 = vmatprep.subr.mxu0 0.0
        %428 = vmatpush1.msra.mxu0 0.0
        %429 = vmatprep.subr.mxu0 0.0
        %430 = vmatpush1.msra.mxu0 0.0
        %431 = vmatprep.subr.mxu0 0.0
        %432 = vmatpush1.msra.mxu0 0.0
        %433 = vmatprep.mubr.f32.mxu0 0.0
        %434 = vmatmul.mubr.f32.gmra.mrb[0].mxu0 %v367
        %v435 = vpop.f32.mrb[0].mxu0
        %v436 = vadd.f32 0.0, %v435
        %v437 = vpop.f32.mrb[0].mxu0
        %v438 = vadd.f32 0.0, %v437
        %439 = vdwg.mxu0
        %v441 = vcombine.high %v360, %v360
        %vm442 = vcmask 31744
        %v444 = vsel %vm442, %v363, 0
        %vm446 = vcmask 1043456
        %v447 = vsel %vm446, %v360, 0
        %v449 = vsel %vm446, %v441, 0
        %451 = vmatprep.subr.mxu0 %v449
        %452 = vmatpush1.msra.mxu0 %v447
        %453 = vmatprep.subr.mxu0 0.0
        %454 = vmatpush1.msra.mxu0 0.0
        %455 = vmatprep.subr.mxu0 0.0
        %456 = vmatpush1.msra.mxu0 0.0
        %457 = vmatprep.subr.mxu0 0.0
        %458 = vmatpush1.msra.mxu0 0.0
        %459 = vmatprep.subr.mxu0 0.0
        %460 = vmatpush1.msra.mxu0 0.0
        %461 = vmatprep.subr.mxu0 0.0
        %462 = vmatpush1.msra.mxu0 0.0
        %463 = vmatprep.subr.mxu0 0.0
        %464 = vmatpush1.msra.mxu0 0.0
        %465 = vmatprep.subr.mxu0 0.0
        %466 = vmatpush1.msra.mxu0 0.0
        %467 = vmatprep.subr.mxu0 0.0
        %468 = vmatpush1.msra.mxu0 0.0
        %469 = vmatprep.subr.mxu0 0.0
        %470 = vmatpush1.msra.mxu0 0.0
        %471 = vmatprep.subr.mxu0 0.0
        %472 = vmatpush1.msra.mxu0 0.0
        %473 = vmatprep.subr.mxu0 0.0
        %474 = vmatpush1.msra.mxu0 0.0
        %475 = vmatprep.subr.mxu0 0.0
        %476 = vmatpush1.msra.mxu0 0.0
        %477 = vmatprep.subr.mxu0 0.0
        %478 = vmatpush1.msra.mxu0 0.0
        %479 = vmatprep.subr.mxu0 0.0
        %480 = vmatpush1.msra.mxu0 0.0
        %481 = vmatprep.subr.mxu0 0.0
        %482 = vmatpush1.msra.mxu0 0.0
        %483 = vmatprep.subr.mxu0 0.0
        %484 = vmatpush1.msra.mxu0 0.0
        %485 = vmatprep.subr.mxu0 0.0
        %486 = vmatpush1.msra.mxu0 0.0
        %487 = vmatprep.subr.mxu0 0.0
        %488 = vmatpush1.msra.mxu0 0.0
        %489 = vmatprep.subr.mxu0 0.0
        %490 = vmatpush1.msra.mxu0 0.0
        %491 = vmatprep.subr.mxu0 0.0
        %492 = vmatpush1.msra.mxu0 0.0
        %493 = vmatprep.subr.mxu0 0.0
        %494 = vmatpush1.msra.mxu0 0.0
        %495 = vmatprep.subr.mxu0 0.0
        %496 = vmatpush1.msra.mxu0 0.0
        %497 = vmatprep.subr.mxu0 0.0
        %498 = vmatpush1.msra.mxu0 0.0
        %499 = vmatprep.subr.mxu0 0.0
        %500 = vmatpush1.msra.mxu0 0.0
        %501 = vmatprep.subr.mxu0 0.0
        %502 = vmatpush1.msra.mxu0 0.0
        %503 = vmatprep.subr.mxu0 0.0
        %504 = vmatpush1.msra.mxu0 0.0
        %505 = vmatprep.subr.mxu0 0.0
        %506 = vmatpush1.msra.mxu0 0.0
        %507 = vmatprep.subr.mxu0 0.0
        %508 = vmatpush1.msra.mxu0 0.0
        %509 = vmatprep.subr.mxu0 0.0
        %510 = vmatpush1.msra.mxu0 0.0
        %511 = vmatprep.subr.mxu0 0.0
        %512 = vmatpush1.msra.mxu0 0.0
        %513 = vmatprep.subr.mxu0 0.0
        %514 = vmatpush1.msra.mxu0 0.0
        %515 = vmatprep.mubr.f32.mxu0 0.0
        %516 = vmatmul.mubr.f32.gmra.mrb[0].mxu0 %v444
        %v517 = vpop.f32.mrb[0].mxu0
        %v518 = vadd.f32 %v436, %v517
        %v519 = vpop.f32.mrb[0].mxu0
        %v520 = vadd.f32 %v438, %v519
        %521 = vdwg.mxu0
        %v522 = vld [vmem:[%s3] sm:$0x3]
        %524 = vset.pattern.permute.xlu0 0
        %525 = vperm.xlu0 %524, %v522
        %v526 = vpop.permute.xlu0 %525
        %v528 = vadd.f32 %v518, %v526
        %v529 = vadd.f32 %v520, %v526
        %v530 = vmax.f32 %v528, 0.0
        %v531 = vmax.f32 %v529, 0.0
        %v532 = vld [vmem:[%s5] sm:$0x1]
        %v533 = vld [vmem:[#allocation2] sm:$0x1]
        %535 = vset.pattern.permute.xlu0 0
        %536 = vperm.xlu0 %535, %v533
        %v537 = vpop.permute.xlu0 %536
        %v539 = vlaneseq
        %v540 = vshrl.u32 %v539, 7
        %v541 = vsub.s32 0, %v540
        %v542 = vrot.slane %v537, %v541
        %vm543 = vcmask 15360
        %v545 = vsel %vm543, %v532, 0
        %vm547 = vcmask 1041408
        %v549 = vsel %vm547, %v530, 0
        %v552 = vsel %vm547, %v531, 0
        %554 = vmatprep.subr.mxu0 %v552
        %555 = vmatpush1.msra.mxu0 %v549
        %556 = vmatprep.subr.mxu0 0.0
        %557 = vmatpush1.msra.mxu0 0.0
        %558 = vmatprep.subr.mxu0 0.0
        %559 = vmatpush1.msra.mxu0 0.0
        %560 = vmatprep.subr.mxu0 0.0
        %561 = vmatpush1.msra.mxu0 0.0
        %562 = vmatprep.subr.mxu0 0.0
        %563 = vmatpush1.msra.mxu0 0.0
        %564 = vmatprep.subr.mxu0 0.0
        %565 = vmatpush1.msra.mxu0 0.0
        %566 = vmatprep.subr.mxu0 0.0
        %567 = vmatpush1.msra.mxu0 0.0
        %568 = vmatprep.subr.mxu0 0.0
        %569 = vmatpush1.msra.mxu0 0.0
        %570 = vmatprep.subr.mxu0 0.0
        %571 = vmatpush1.msra.mxu0 0.0
        %572 = vmatprep.subr.mxu0 0.0
        %573 = vmatpush1.msra.mxu0 0.0
        %574 = vmatprep.subr.mxu0 0.0
        %575 = vmatpush1.msra.mxu0 0.0
        %576 = vmatprep.subr.mxu0 0.0
        %577 = vmatpush1.msra.mxu0 0.0
        %578 = vmatprep.subr.mxu0 0.0
        %579 = vmatpush1.msra.mxu0 0.0
        %580 = vmatprep.subr.mxu0 0.0
        %581 = vmatpush1.msra.mxu0 0.0
        %582 = vmatprep.subr.mxu0 0.0
        %583 = vmatpush1.msra.mxu0 0.0
        %584 = vmatprep.subr.mxu0 0.0
        %585 = vmatpush1.msra.mxu0 0.0
        %586 = vmatprep.subr.mxu0 0.0
        %587 = vmatpush1.msra.mxu0 0.0
        %588 = vmatprep.subr.mxu0 0.0
        %589 = vmatpush1.msra.mxu0 0.0
        %590 = vmatprep.subr.mxu0 0.0
        %591 = vmatpush1.msra.mxu0 0.0
        %592 = vmatprep.subr.mxu0 0.0
        %593 = vmatpush1.msra.mxu0 0.0
        %594 = vmatprep.subr.mxu0 0.0
        %595 = vmatpush1.msra.mxu0 0.0
        %596 = vmatprep.subr.mxu0 0.0
        %597 = vmatpush1.msra.mxu0 0.0
        %598 = vmatprep.subr.mxu0 0.0
        %599 = vmatpush1.msra.mxu0 0.0
        %600 = vmatprep.subr.mxu0 0.0
        %601 = vmatpush1.msra.mxu0 0.0
        %602 = vmatprep.subr.mxu0 0.0
        %603 = vmatpush1.msra.mxu0 0.0
        %604 = vmatprep.subr.mxu0 0.0
        %605 = vmatpush1.msra.mxu0 0.0
        %606 = vmatprep.subr.mxu0 0.0
        %607 = vmatpush1.msra.mxu0 0.0
        %608 = vmatprep.subr.mxu0 0.0
        %609 = vmatpush1.msra.mxu0 0.0
        %610 = vmatprep.subr.mxu0 0.0
        %611 = vmatpush1.msra.mxu0 0.0
        %612 = vmatprep.subr.mxu0 0.0
        %613 = vmatpush1.msra.mxu0 0.0
        %614 = vmatprep.subr.mxu0 0.0
        %615 = vmatpush1.msra.mxu0 0.0
        %616 = vmatprep.subr.mxu0 0.0
        %617 = vmatpush1.msra.mxu0 0.0
        %618 = vmatprep.mubr.f32.mxu0 0.0
        %619 = vmatmul.mubr.f32.gmra.mrb[0].mxu0 %v545
        %v620 = vpop.f32.mrb[0].mxu0
        %v621 = vadd.f32 %v542, %v620
        %v622 = vpop.f32.mrb[0].mxu0
        %v623 = vadd.f32 %v542, %v622
        %624 = vdwg.mxu0
        %v625 = vxor.u32 %v621, 2147483648
        %v626 = vxor.u32 %v623, 2147483648
        %v627 = vmul.f32 %v625, 1.442695
        %v628 = vpow.pop %v627
        %v629 = vmul.f32 %v626, 1.442695
        %v630 = vpow.pop %v629
        %v631 = vadd.f32 %v628, 1.0
        %v632 = vadd.f32 %v630, 1.0
        %v633 = vrcp.pop %v631
        %v634 = vmul.f32 1.0, %v633
        %v635 = vrcp.pop %v632
        %v636 = vmul.f32 1.0, %v635
        %v637 = vlaneseq
        %v638 = vshrl.u32 %v637, 7
        %v639 = vsub.s32 0, %v638
        %v640 = vrot.slane %v634, %v639
        %v641 = vlaneseq
        %v642 = vshrl.u32 %v641, 7
        %v643 = vsub.s32 0, %v642
        %v644 = vrot.slane %v636, %v643
        %v646 = vmul.f32 %v640, %v360
        %v647 = vmul.f32 %v644, %v441
        %v650 = vcombine.low %v646, %v647
        %652 = vst [vmem:[%s356] sm:$0xff] %v650
        %s653 = sand.u32 %s212, 1
        %s654 = scalar_lea.sflag [#allocation5], %s653
        %s655 = sand.u32 %s212, 1
        %s656 = smul.addr %s655, 8
        %s657 = scalar_lea.vmem [#allocation8], %s656
        // Predicated region
        $region57: #{tpu_custom_call.1} parent=47 // pred_check
          %p658 = pneg %p222
        $region58: #{tpu_custom_call.1} parent=47 // pred_check_branch
          %660 = sbr.rel (%p658) target = $region60
        $region59: #{tpu_custom_call.1} parent=47 // pred_region
          %s661 = smul.u32 2, %s34
          %s663 = ssub.s32 128, 128
          %664 = vsyncadd %s654, %s663
          %s665 = smul.addr %s33, 2
          %s666 = sadd.s32 %s661, %s665
          %s667 = smul.addr %s666, 64
          %s668 = scalar_lea.hbm %s7, %s667
          %s670 = sshll.u32 %s657, 4
          %s671 = int_to_ptr.vmem [resolvable:$true] %s670
          %673 = dma.vmem_to_hbm [thread:$0]  %s671, 128, %s668, %s654
        $region60: #{tpu_custom_call.1} parent=47 // pred_fallthru
          _
      $region48: #{tpu_custom_call.1} parent=5 // pred_fallthru
        _
      %p674 = scmp.le.s32.totalorder 2, %s24
      // Predicated region
      $region61: #{tpu_custom_call.1} parent=5 // pred_check
        %p675 = pneg %p674
      $region62: #{tpu_custom_call.1} parent=5 // pred_check_branch
        %677 = sbr.rel (%p675) target = $region64
      $region63: #{tpu_custom_call.1} parent=5 // pred_region
        %s678 = ssub.s32 %s24, 2
        // Predicated region
        $region65: #{tpu_custom_call.1} parent=63 // pred_check
          %p679 = pneg %p228
        $region66: #{tpu_custom_call.1} parent=63 // pred_check_branch
          %681 = sbr.rel (%p679) target = $region68
        $region67: #{tpu_custom_call.1} parent=63 // pred_region
          %s682 = sand.u32 %s213, 1
          %s683 = scalar_lea.sflag [#allocation5], %s682
          %s684 = sand.u32 %s213, 1
          %s685 = smul.addr %s684, 8
          %s686 = scalar_lea.vmem [#allocation8], %s685
          %687 = dma.done %s683, 128
        $region68: #{tpu_custom_call.1} parent=63 // pred_fallthru
          _
      $region64: #{tpu_custom_call.1} parent=5 // pred_fallthru
        _
    $region6: #{tpu_custom_call.1} parent=1 // loop_footer
      %s28 = sadd.s32 1, %s24
    $region7: #{tpu_custom_call.1} parent=1 // loop_footer_branch
      %23 = sbr.rel target = $region3
    $region8: #{tpu_custom_call.1} parent=1 // loop_exit
      _
    %688 = vsyncpa [#allocation4], 1
    %s689 = scalar_lea.sflag [#allocation4], 1
    %690 = vsyncpa %s689, 1
    %691 = vsyncpa [#allocation7], 1
    %s692 = scalar_lea.sflag [#allocation7], 1
    %693 = vsyncpa %s692, 1
    %694 = vsyncpa [#allocation5], 1
    %s695 = scalar_lea.sflag [#allocation5], 1
    %696 = vsyncpa %s695, 1

</llo_original>
